<compile_context>
chip_gen: v7x
topology: tpu7x:2x2x1
jax: 0.10.0
libtpu: 0.0.40
codegen_flags: <defaults>
</compile_context>

<pallas_src>
import jax
import jax.numpy as jnp
from jax import lax
from jax.experimental import pallas as pl
from jax.experimental.pallas import tpu as pltpu


def _round_up(x: int, m: int) -> int:
    return (x + m - 1) // m * m


def _swiglu_expert_kernel(tile_expert_ref, x_ref, wg_ref, wu_ref, wd_ref,
                          o_ref, acc_ref):
    # tile_expert_ref : SMEM (num_tiles,) int32 (scalar prefetch; used by index_maps)
    # x_ref  : VMEM (TM, Dp)      token tile (bf16)
    # wg_ref : VMEM (1, TH, Dp)   gate_proj[expert, h_tile]
    # wu_ref : VMEM (1, TH, Dp)   up_proj[expert, h_tile]
    # wd_ref : VMEM (1, Dp, TH)   down_proj[expert, :, h_tile]
    # o_ref  : VMEM (TM, Dp)      output tile (resident across the h axis)
    # acc_ref: VMEM (TM, Dp) f32  accumulator scratch
    h = pl.program_id(1)

    @pl.when(h == 0)
    def _():
        acc_ref[...] = jnp.zeros_like(acc_ref)

    xv = x_ref[...]        # (TM, Dp)  bf16
    wg = wg_ref[0]         # (TH, Dp)  bf16
    wu = wu_ref[0]         # (TH, Dp)  bf16
    wd = wd_ref[0]         # (Dp, TH)  bf16

    # Contract the last dim of both operands -> MXU consumes operands in place.
    contract_last = (((1,), (1,)), ((), ()))
    g = lax.dot_general(xv, wg, contract_last, preferred_element_type=jnp.float32)
    u = lax.dot_general(xv, wu, contract_last, preferred_element_type=jnp.float32)
    hact = (jax.nn.silu(g) * u).astype(wd.dtype)       # SiLU/gating in f32, cast to bf16
    acc_ref[...] += lax.dot_general(hact, wd, contract_last,
                                    preferred_element_type=jnp.float32)

    @pl.when(h == pl.num_programs(1) - 1)
    def _():
        o_ref[...] = acc_ref[...].astype(o_ref.dtype)


def swiglu_experts(x, expert_indices, gate_proj, up_proj, down_proj, *,
                   tm=128, th=256, compute_dtype=jnp.bfloat16,
                   vmem_limit_bytes=None):
    """Sparse-MoE SwiGLU experts.

    x: (T, D); expert_indices: (T, A) int32 in [0, E);
    gate_proj/up_proj: (E, H, D); down_proj: (E, D, H).
    Returns (T, A, D) == einsum('tah,tadh->tad', silu(x@Wg^T) * (x@Wu^T), Wd).
    """
    assert tm % 8 == 0 and th % 128 == 0
    T, D = x.shape
    A = expert_indices.shape[1]
    E, H, _ = gate_proj.shape
    N = T * A

    Dp = _round_up(D, 128)          # lane-dense feature dim
    Hp = _round_up(H, th)           # hidden dim rounded to the h-tile
    num_h_tiles = Hp // th

    # ---- expert-grouped token ordering (all static shapes) -------------------
    flat_e = expert_indices.reshape(-1).astype(jnp.int32)             # (N,)
    sort_idx = jnp.argsort(flat_e, stable=True)                       # sorted pos -> flat pair
    sorted_e = flat_e[sort_idx]                                       # (N,)

    counts = jnp.zeros((E,), jnp.int32).at[flat_e].add(1)             # pairs per expert
    padded_counts = ((counts + tm - 1) // tm) * tm                    # TM-align each group
    pad_end = jnp.cumsum(padded_counts)
    pad_start = pad_end - padded_counts
    sorted_start = jnp.cumsum(counts) - counts

    num_tiles = pl.cdiv(N, tm) + E       # static upper bound on token tiles
    P = num_tiles * tm

    s = jnp.arange(N, dtype=jnp.int32)
    # position of each sorted pair inside the TM-padded, expert-grouped buffer
    padded_pos = pad_start[sorted_e] + (s - sorted_start[sorted_e])   # (N,)
    # flat pair -> its row in the padded buffer (to gather results back)
    pair_pos = jnp.zeros((N,), jnp.int32).at[sort_idx].set(padded_pos)
    # padded row -> source token (padding rows read token 0; results discarded)
    row_token = jnp.zeros((P,), jnp.int32).at[padded_pos].set(sort_idx // A)
    # expert id owning each TM-row tile (groups are TM-aligned by construction)
    tile_start = jnp.arange(num_tiles, dtype=jnp.int32) * tm
    tile_expert = jnp.minimum(
        jnp.sum(tile_start[:, None] >= pad_end[None, :], axis=1), E - 1
    ).astype(jnp.int32)

    # ---- bf16 cast + zero-pad to lane-dense shapes ----------------------------
    x_p = jnp.pad(x, ((0, 0), (0, Dp - D))).astype(compute_dtype)
    x_sorted = x_p[row_token]                                          # (P, Dp)
    wg_p = jnp.pad(gate_proj, ((0, 0), (0, Hp - H), (0, Dp - D))).astype(compute_dtype)
    wu_p = jnp.pad(up_proj, ((0, 0), (0, Hp - H), (0, Dp - D))).astype(compute_dtype)
    wd_p = jnp.pad(down_proj, ((0, 0), (0, Dp - D), (0, Hp - H))).astype(compute_dtype)

    grid_spec = pltpu.PrefetchScalarGridSpec(
        num_scalar_prefetch=1,
        grid=(num_tiles, num_h_tiles),
        in_specs=[
            pl.BlockSpec((tm, Dp), lambda g, h, te: (g, 0)),            # token tile
            pl.BlockSpec((1, th, Dp), lambda g, h, te: (te[g], h, 0)),  # gate_proj[e]
            pl.BlockSpec((1, th, Dp), lambda g, h, te: (te[g], h, 0)),  # up_proj[e]
            pl.BlockSpec((1, Dp, th), lambda g, h, te: (te[g], 0, h)),  # down_proj[e]
        ],
        out_specs=pl.BlockSpec((tm, Dp), lambda g, h, te: (g, 0)),
        scratch_shapes=[pltpu.VMEM((tm, Dp), jnp.float32)],
    )

    w_item = jnp.dtype(compute_dtype).itemsize
    cost = pl.CostEstimate(
        flops=6 * P * Dp * Hp,
        transcendentals=P * Hp,
        bytes_accessed=(num_tiles * num_h_tiles * 3 * th * Dp * w_item
                        + P * Dp * w_item
                        + P * Dp * jnp.dtype(x.dtype).itemsize),
    )

    out_sorted = pl.pallas_call(
        _swiglu_expert_kernel,
        out_shape=jax.ShapeDtypeStruct((P, Dp), x.dtype),
        grid_spec=grid_spec,
        compiler_params=pltpu.CompilerParams(
            dimension_semantics=("parallel", "arbitrary"),
            vmem_limit_bytes=vmem_limit_bytes),
        cost_estimate=cost,
    )(tile_expert, x_sorted, wg_p, wu_p, wd_p)

    out = out_sorted[pair_pos][:, :D].reshape(T, A, D)
    return out


def _reference_experts(x, expert_indices, gate_proj, up_proj, down_proj,
                       compute_dtype=jnp.bfloat16):
    # Pure-JAX reference mirroring the kernel's precision policy
    # (bf16 operands, f32 accumulation, f32 SiLU, bf16 hidden activation).
    xc = x.astype(compute_dtype)
    w_g = gate_proj[expert_indices].astype(compute_dtype)   # (T, A, H, D)
    w_u = up_proj[expert_indices].astype(compute_dtype)     # (T, A, H, D)
    w_d = down_proj[expert_indices].astype(compute_dtype)   # (T, A, D, H)
    g = jnp.einsum('td,tahd->tah', xc, w_g, preferred_element_type=jnp.float32)
    u = jnp.einsum('td,tahd->tah', xc, w_u, preferred_element_type=jnp.float32)
    h = (jax.nn.silu(g) * u).astype(compute_dtype)
    out = jnp.einsum('tah,tadh->tad', h, w_d, preferred_element_type=jnp.float32)
    return out.astype(x.dtype)


if __name__ == "__main__":
    # Small shapes consistent with SwiGLUSparseMoe:
    # tokens, active experts, experts, n_in, n_hidden
    T, A, E, D, H = 16, 2, 4, 128, 256

    key = jax.random.PRNGKey(0)
    k_x, k_g, k_u, k_d, k_r = jax.random.split(key, 5)

    x = jax.random.normal(k_x, (T, D), dtype=jnp.float32)
    gate_proj = jax.random.normal(k_g, (E, H, D), dtype=jnp.float32) * 0.05
    up_proj = jax.random.normal(k_u, (E, H, D), dtype=jnp.float32) * 0.05
    down_proj = jax.random.normal(k_d, (E, D, H), dtype=jnp.float32) * 0.05

    # SwiGLUSparseMoe router (plain JAX): gate linear -> softmax -> top-k.
    router_w = jax.random.normal(k_r, (E, D), dtype=jnp.float32) * 0.05
    logits = x @ router_w.T
    probs = jax.nn.softmax(logits.astype(jnp.float32), axis=-1)
    probs, expert_indices = lax.top_k(probs, A)
    probs = probs / probs.sum(axis=-1, keepdims=True)   # norm_probs=True (unused by experts)
    expert_indices = expert_indices.astype(jnp.int32)

    out = swiglu_experts(x, expert_indices, gate_proj, up_proj, down_proj,
                         tm=8, th=128)
    out = jax.block_until_ready(out)

    ref = _reference_experts(x, expert_indices, gate_proj, up_proj, down_proj)
    assert out.shape == (T, A, D)
    assert jnp.allclose(out, ref, atol=2e-2, rtol=2e-2), "mismatch vs reference"

    print("KERNEL_OK")
</pallas_src>

<mosaic_0001>
module attributes {stable_mosaic.version = 11 : i64} {
  func.func @_swiglu_expert_kernel(%arg0: i32, %arg1: i32, %arg2: memref<8xi32, #tpu.memory_space<smem>>, %arg3: memref<8x128xbf16, #tpu.memory_space<vmem>>, %arg4: memref<1x128x128xbf16, #tpu.memory_space<vmem>>, %arg5: memref<1x128x128xbf16, #tpu.memory_space<vmem>>, %arg6: memref<1x128x128xbf16, #tpu.memory_space<vmem>>, %arg7: memref<8x128xf32, #tpu.memory_space<vmem>>, %arg8: memref<8x128xf32, #tpu.memory_space<vmem>>) attributes {dimension_semantics = [#tpu.dimension_semantics<parallel>, #tpu.dimension_semantics<arbitrary>], iteration_bounds = array<i64: 8, 2>, scalar_prefetch = 1 : i64, scratch_operands = 1 : i64, tpu.core_type = #tpu.core_type<tc>, window_params = [{transform_indices = @transform_0, window_bounds = array<i64: 8, 128>}, {transform_indices = @transform_1, window_bounds = array<i64: 1, 128, 128>}, {transform_indices = @transform_2, window_bounds = array<i64: 1, 128, 128>}, {transform_indices = @transform_3, window_bounds = array<i64: 1, 128, 128>}, {transform_indices = @transform_4, window_bounds = array<i64: 8, 128>}]} {
    %c0_i32 = arith.constant 0 : i32
    %0 = arith.cmpi eq, %arg1, %c0_i32 : i32
    %1 = arith.extui %0 : i1 to i32
    %c0_i32_0 = arith.constant 0 : i32
    %2 = arith.cmpi ne, %1, %c0_i32_0 : i32
    scf.if %2 {
      %cst_19 = arith.constant 0.000000e+00 : f32
      %27 = vector.broadcast %cst_19 : f32 to vector<8x128xf32>
      %c0_20 = arith.constant 0 : index
      %c0_21 = arith.constant 0 : index
      %28 = vector.load %arg8[%c0_20, %c0_21] : memref<8x128xf32, #tpu.memory_space<vmem>>, vector<8x128xf32>
      tpu.vector_store %arg8[%c0_20, %c0_21], %27 {strides = array<i32>} : memref<8x128xf32, #tpu.memory_space<vmem>>, vector<8x128xf32>,
    } else {
    }
    %c0 = arith.constant 0 : index
    %c0_1 = arith.constant 0 : index
    %3 = vector.load %arg3[%c0, %c0_1] : memref<8x128xbf16, #tpu.memory_space<vmem>>, vector<8x128xbf16>
    %c0_2 = arith.constant 0 : index
    %c0_3 = arith.constant 0 : index
    %c0_4 = arith.constant 0 : index
    %4 = vector.load %arg4[%c0_2, %c0_3, %c0_4] : memref<1x128x128xbf16, #tpu.memory_space<vmem>>, vector<1x128x128xbf16>
    %5 = vector.shape_cast %4 : vector<1x128x128xbf16> to vector<128x128xbf16>
    %c0_5 = arith.constant 0 : index
    %c0_6 = arith.constant 0 : index
    %c0_7 = arith.constant 0 : index
    %6 = vector.load %arg5[%c0_5, %c0_6, %c0_7] : memref<1x128x128xbf16, #tpu.memory_space<vmem>>, vector<1x128x128xbf16>
    %7 = vector.shape_cast %6 : vector<1x128x128xbf16> to vector<128x128xbf16>
    %c0_8 = arith.constant 0 : index
    %c0_9 = arith.constant 0 : index
    %c0_10 = arith.constant 0 : index
    %8 = vector.load %arg6[%c0_8, %c0_9, %c0_10] : memref<1x128x128xbf16, #tpu.memory_space<vmem>>, vector<1x128x128xbf16>
    %9 = vector.shape_cast %8 : vector<1x128x128xbf16> to vector<128x128xbf16>
    %cst = arith.constant dense<0.000000e+00> : vector<8x128xf32>
    %10 = tpu.matmul %3, %5, %cst {dimension_numbers = #tpu.dot_dimension_numbers<[1], [1], [0], [0], [0, 0, 1, 0], [], []>} : vector<8x128xbf16>, vector<128x128xbf16>, vector<8x128xf32> -> vector<8x128xf32>
    %cst_11 = arith.constant dense<0.000000e+00> : vector<8x128xf32>
    %11 = tpu.matmul %3, %7, %cst_11 {dimension_numbers = #tpu.dot_dimension_numbers<[1], [1], [0], [0], [0, 0, 1, 0], [], []>} : vector<8x128xbf16>, vector<128x128xbf16>, vector<8x128xf32> -> vector<8x128xf32>
    %12 = arith.negf %10 : vector<8x128xf32>
    %13 = math.exp %12 : vector<8x128xf32>
    %cst_12 = arith.constant 1.000000e+00 : f32
    %14 = vector.broadcast %cst_12 : f32 to vector<8x128xf32>
    %15 = arith.addf %14, %13 : vector<8x128xf32>
    %16 = arith.divf %14, %15 : vector<8x128xf32>
    %17 = arith.mulf %10, %16 : vector<8x128xf32>
    %18 = arith.mulf %17, %11 : vector<8x128xf32>
    %19 = arith.truncf %18 : vector<8x128xf32> to vector<8x128xbf16>
    %c0_13 = arith.constant 0 : index
    %c0_14 = arith.constant 0 : index
    %20 = vector.load %arg8[%c0_13, %c0_14] : memref<8x128xf32, #tpu.memory_space<vmem>>, vector<8x128xf32>
    %cst_15 = arith.constant dense<0.000000e+00> : vector<8x128xf32>
    %21 = tpu.matmul %19, %9, %cst_15 {dimension_numbers = #tpu.dot_dimension_numbers<[1], [1], [0], [0], [0, 0, 1, 0], [], []>} : vector<8x128xbf16>, vector<128x128xbf16>, vector<8x128xf32> -> vector<8x128xf32>
    %22 = arith.addf %20, %21 : vector<8x128xf32>
    %c0_16 = arith.constant 0 : index
    %c0_17 = arith.constant 0 : index
    %23 = vector.load %arg8[%c0_16, %c0_17] : memref<8x128xf32, #tpu.memory_space<vmem>>, vector<8x128xf32>
    tpu.vector_store %arg8[%c0_16, %c0_17], %22 {strides = array<i32>} : memref<8x128xf32, #tpu.memory_space<vmem>>, vector<8x128xf32>,
    %c1_i32 = arith.constant 1 : i32
    %24 = arith.cmpi eq, %arg1, %c1_i32 : i32
    %25 = arith.extui %24 : i1 to i32
    %c0_i32_18 = arith.constant 0 : i32
    %26 = arith.cmpi ne, %25, %c0_i32_18 : i32
    scf.if %26 {
      %c0_19 = arith.constant 0 : index
      %c0_20 = arith.constant 0 : index
      %27 = vector.load %arg8[%c0_19, %c0_20] : memref<8x128xf32, #tpu.memory_space<vmem>>, vector<8x128xf32>
      %c0_21 = arith.constant 0 : index
      %c0_22 = arith.constant 0 : index
      %28 = vector.load %arg7[%c0_21, %c0_22] : memref<8x128xf32, #tpu.memory_space<vmem>>, vector<8x128xf32>
      tpu.vector_store %arg7[%c0_21, %c0_22], %27 {strides = array<i32>} : memref<8x128xf32, #tpu.memory_space<vmem>>, vector<8x128xf32>,
    } else {
    }
    return
  }
  func.func @transform_0(%arg0: i32, %arg1: i32, %arg2: memref<8xi32, #tpu.memory_space<smem>>) -> (i32, i32) {
    %c0_i32 = arith.constant 0 : i32
    %c0_i32_0 = arith.constant 0 : i32
    return %arg0, %c0_i32 : i32, i32
  }
  func.func @transform_1(%arg0: i32, %arg1: i32, %arg2: memref<8xi32, #tpu.memory_space<smem>>) -> (i32, i32, i32) {
    %0 = arith.index_cast %arg0 : i32 to index
    %1 = memref.load %arg2[%0] : memref<8xi32, #tpu.memory_space<smem>>
    %c0_i32 = arith.constant 0 : i32
    %c0_i32_0 = arith.constant 0 : i32
    return %1, %arg1, %c0_i32 : i32, i32, i32
  }
  func.func @transform_2(%arg0: i32, %arg1: i32, %arg2: memref<8xi32, #tpu.memory_space<smem>>) -> (i32, i32, i32) {
    %0 = arith.index_cast %arg0 : i32 to index
    %1 = memref.load %arg2[%0] : memref<8xi32, #tpu.memory_space<smem>>
    %c0_i32 = arith.constant 0 : i32
    %c0_i32_0 = arith.constant 0 : i32
    return %1, %arg1, %c0_i32 : i32, i32, i32
  }
  func.func @transform_3(%arg0: i32, %arg1: i32, %arg2: memref<8xi32, #tpu.memory_space<smem>>) -> (i32, i32, i32) {
    %0 = arith.index_cast %arg0 : i32 to index
    %1 = memref.load %arg2[%0] : memref<8xi32, #tpu.memory_space<smem>>
    %c0_i32 = arith.constant 0 : i32
    %c0_i32_0 = arith.constant 0 : i32
    return %1, %c0_i32, %arg1 : i32, i32, i32
  }
  func.func @transform_4(%arg0: i32, %arg1: i32, %arg2: memref<8xi32, #tpu.memory_space<smem>>) -> (i32, i32) {
    %c0_i32 = arith.constant 0 : i32
    %c0_i32_0 = arith.constant 0 : i32
    return %arg0, %c0_i32 : i32, i32
  }
}

</mosaic_0001>

<llo_original>
// kernel: tpu_custom_call.1
$region0: #{tpu_custom_call.1}
  #allocation0 [shape = 'u32[]', space=smem, size = 0x4, offset = 0x4, fixed_abs, tag = 'smem constant byte address 0x4 - core index']
  #allocation1 [shape = 'u32[144,128]{1,0:T(1,128)}', space=vmem, size = 0x12000, scoped, tag = 'internal scratch']
  #allocation2 [shape = 'f32[8,128]{1,0:T(8,128)}', space=vmem, size = 0x1000, scoped, tag = 'scratch operand']
  #allocation3 [shape = 's32[1]{0}', space=sflag, size = 0x4, scoped, tag = 'scoped memory for tpu_custom_call.1']
  #allocation4 [shape = 'u8[512]{0}', space=smem, size = 0x200, scoped, tag = 'prefetched SMEM operand 0']
  %s0 = inlined_call_operand.hbm [shape: s32[8], index: 0, kind: input, shape index: {}]
  %s1 = inlined_call_operand.hbm [shape: bf16[64,128], index: 1, kind: input, shape index: {}]
  %s2 = inlined_call_operand.hbm [shape: bf16[4,256,128], index: 2, kind: input, shape index: {}]
  %s3 = inlined_call_operand.hbm [shape: bf16[4,256,128], index: 3, kind: input, shape index: {}]
  %s4 = inlined_call_operand.hbm [shape: bf16[4,128,256], index: 4, kind: input, shape index: {}]
  %s5 = inlined_call_operand.hbm [shape: f32[64,128], index: 5, kind: output, shape index: {}]
  %s6 = sld [smem:[#allocation0]]
  $region73: #{tpu_custom_call.1} parent=0
    _
  %s8 = ssub.s32 1, %s6
  %s9 = scalar_select 0, %s8, %s6
  %11 = dma.hbm_to_smem %s0, 16, [#allocation4], [#allocation3]
  %12 = dma.done [#allocation3], 16
  %13 = sfence
  $region1: #{tpu_custom_call.1} parent=0
    #allocation5 [shape = 'u8[4096]{0}', space=vmem, size = 0x1000, scoped, tag = 'input window, operand 1']
    #allocation6 [shape = 's32[2]{0}', space=sflag, size = 0x8, scoped, tag = 'scoped memory for tpu_custom_call.1']
    #allocation7 [shape = 's32[2]{0}', space=sflag, size = 0x8, scoped, tag = 'scoped memory for tpu_custom_call.1']
    #allocation8 [shape = 'u8[65536]{0}', space=vmem, size = 0x10000, scoped, tag = 'input window, operand 2']
    #allocation9 [shape = 's32[2]{0}', space=sflag, size = 0x8, scoped, tag = 'scoped memory for tpu_custom_call.1']
    #allocation10 [shape = 'u8[65536]{0}', space=vmem, size = 0x10000, scoped, tag = 'input window, operand 3']
    #allocation11 [shape = 'u8[65536]{0}', space=vmem, size = 0x10000, scoped, tag = 'input window, operand 4']
    #allocation12 [shape = 's32[2]{0}', space=sflag, size = 0x8, scoped, tag = 'scoped memory for tpu_custom_call.1']
    #allocation13 [shape = 'u8[8192]{0}', space=vmem, size = 0x2000, scoped, tag = 'output window, operand 0']
    %14 = vsyncpa [#allocation6], 0
    %s15 = scalar_lea.sflag [#allocation6], 1
    %16 = vsyncpa %s15, 0
    %17 = vsyncpa [#allocation9], 0
    %s18 = scalar_lea.sflag [#allocation9], 1
    %19 = vsyncpa %s18, 0
    %20 = vsyncpa [#allocation12], 0
    %s21 = scalar_lea.sflag [#allocation12], 1
    %22 = vsyncpa %s21, 0
    %23 = vsyncpa [#allocation7], 0
    %s24 = scalar_lea.sflag [#allocation7], 1
    %25 = vsyncpa %s24, 0
    loop: start=0, step=1, limit=18
    $region2: #{tpu_custom_call.1} parent=1 // loop_pre_header
      _
    $region3: #{tpu_custom_call.1} parent=1 // loop_header
      %s27 = sphi 0, %s31
      %p28 = scmp.ge.s32.totalorder %s27, 18
      %s34 = sphi 0, %s46
      %s35 = sphi 0, %s42
      %s36 = sphi 0, %s34
      %s37 = sphi 0, %s35
      %s38 = sphi 0, %s36
      %s39 = sphi 0, %s37
      %s49 = sphi 0, %s51
      %s52 = sphi 0, %s49
      %s53 = sphi 0, %s52
      %s69 = sphi 0, %s53
      %s79 = sphi 0, %s81
      %s82 = sphi 0, %s79
      %s83 = sphi 0, %s82
      %s99 = sphi 0, %s83
      %s109 = sphi 0, %s111
      %s112 = sphi 0, %s109
      %s113 = sphi 0, %s112
      %s129 = sphi 0, %s113
      %s139 = sphi 0, %s141
      %s142 = sphi 0, %s139
      %s143 = sphi 0, %s142
      %s159 = sphi 0, %s143
      %s165 = sphi 0, %s167
      %s168 = sphi 0, %s165
      %s169 = sphi 0, %s168
      %s185 = sphi 0, %s169
    $region4: #{tpu_custom_call.1} parent=1 // loop_header_branch
      %30 = sbr.rel (%p28) target = $region8
    $region5: #{tpu_custom_call.1} parent=1 // loop_body
      %s32 = ssub.s32 %s27, 1
      %s33 = ssub.s32 %s27, 2
      %s40 = sadd.s32 1, %s35
      %p41 = scmp.ge.s32.totalorder %s40, 2
      %s42 = scalar_select %p41, 0, %s40
      %s43 = sadd.s32 1, %s34
      %s44 = scalar_select %p41, %s43, %s34
      %p45 = scmp.ge.s32.totalorder %s44, 8
      %s46 = scalar_select %p45, 0, %s44
      %s47 = ssub.s32 %s34, %s46
      %p48 = scmp.eq.s32.totalorder %s47, 0
      %s50 = sadd.s32 %s49, 1
      %s51 = scalar_select %p48, %s49, %s50
      %p54 = pneg %p48
      %p55 = scmp.eq.s32.totalorder %s27, 15
      %p56 = por %p54, %p55
      %p57 = scmp.ne.s32.totalorder %s49, %s52
      %p58 = scmp.eq.s32.totalorder %s27, 0
      %p59 = por %p57, %p58
      %p60 = scmp.ne.s32.totalorder %s49, %s52
      %p61 = scmp.eq.s32.totalorder %s32, 15
      %p62 = por %p60, %p61
      %p63 = scmp.ne.s32.totalorder %s52, %s53
      %p64 = scmp.eq.s32.totalorder %s32, 0
      %p65 = por %p63, %p64
      %p66 = scmp.ne.s32.totalorder %s52, %s53
      %p67 = scmp.eq.s32.totalorder %s33, 15
      %p68 = por %p66, %p67
      %p70 = scmp.ne.s32.totalorder %s53, %s69
      %p71 = scmp.eq.s32.totalorder %s33, 0
      %p72 = por %p70, %p71
      %s73 = sld [smem:[#allocation4 + %s34]]
      %s74 = sld [smem:[#allocation4 + %s46]]
      %s75 = ssub.s32 %s73, %s74
      %s76 = ssub.s32 %s35, %s42
      %s77 = sor.u32 %s75, %s76
      %p78 = scmp.eq.s32.totalorder %s77, 0
      %s80 = sadd.s32 %s79, 1
      %s81 = scalar_select %p78, %s79, %s80
      %p84 = pneg %p78
      %p85 = scmp.eq.s32.totalorder %s27, 15
      %p86 = por %p84, %p85
      %p87 = scmp.ne.s32.totalorder %s79, %s82
      %p88 = scmp.eq.s32.totalorder %s27, 0
      %p89 = por %p87, %p88
      %p90 = scmp.ne.s32.totalorder %s79, %s82
      %p91 = scmp.eq.s32.totalorder %s32, 15
      %p92 = por %p90, %p91
      %p93 = scmp.ne.s32.totalorder %s82, %s83
      %p94 = scmp.eq.s32.totalorder %s32, 0
      %p95 = por %p93, %p94
      %p96 = scmp.ne.s32.totalorder %s82, %s83
      %p97 = scmp.eq.s32.totalorder %s33, 15
      %p98 = por %p96, %p97
      %p100 = scmp.ne.s32.totalorder %s83, %s99
      %p101 = scmp.eq.s32.totalorder %s33, 0
      %p102 = por %p100, %p101
      %s103 = sld [smem:[#allocation4 + %s34]]
      %s104 = sld [smem:[#allocation4 + %s46]]
      %s105 = ssub.s32 %s103, %s104
      %s106 = ssub.s32 %s35, %s42
      %s107 = sor.u32 %s105, %s106
      %p108 = scmp.eq.s32.totalorder %s107, 0
      %s110 = sadd.s32 %s109, 1
      %s111 = scalar_select %p108, %s109, %s110
      %p114 = pneg %p108
      %p115 = scmp.eq.s32.totalorder %s27, 15
      %p116 = por %p114, %p115
      %p117 = scmp.ne.s32.totalorder %s109, %s112
      %p118 = scmp.eq.s32.totalorder %s27, 0
      %p119 = por %p117, %p118
      %p120 = scmp.ne.s32.totalorder %s109, %s112
      %p121 = scmp.eq.s32.totalorder %s32, 15
      %p122 = por %p120, %p121
      %p123 = scmp.ne.s32.totalorder %s112, %s113
      %p124 = scmp.eq.s32.totalorder %s32, 0
      %p125 = por %p123, %p124
      %p126 = scmp.ne.s32.totalorder %s112, %s113
      %p127 = scmp.eq.s32.totalorder %s33, 15
      %p128 = por %p126, %p127
      %p130 = scmp.ne.s32.totalorder %s113, %s129
      %p131 = scmp.eq.s32.totalorder %s33, 0
      %p132 = por %p130, %p131
      %s133 = sld [smem:[#allocation4 + %s34]]
      %s134 = sld [smem:[#allocation4 + %s46]]
      %s135 = ssub.s32 %s133, %s134
      %s136 = ssub.s32 %s35, %s42
      %s137 = sor.u32 %s135, %s136
      %p138 = scmp.eq.s32.totalorder %s137, 0
      %s140 = sadd.s32 %s139, 1
      %s141 = scalar_select %p138, %s139, %s140
      %p144 = pneg %p138
      %p145 = scmp.eq.s32.totalorder %s27, 15
      %p146 = por %p144, %p145
      %p147 = scmp.ne.s32.totalorder %s139, %s142
      %p148 = scmp.eq.s32.totalorder %s27, 0
      %p149 = por %p147, %p148
      %p150 = scmp.ne.s32.totalorder %s139, %s142
      %p151 = scmp.eq.s32.totalorder %s32, 15
      %p152 = por %p150, %p151
      %p153 = scmp.ne.s32.totalorder %s142, %s143
      %p154 = scmp.eq.s32.totalorder %s32, 0
      %p155 = por %p153, %p154
      %p156 = scmp.ne.s32.totalorder %s142, %s143
      %p157 = scmp.eq.s32.totalorder %s33, 15
      %p158 = por %p156, %p157
      %p160 = scmp.ne.s32.totalorder %s143, %s159
      %p161 = scmp.eq.s32.totalorder %s33, 0
      %p162 = por %p160, %p161
      %s163 = ssub.s32 %s34, %s46
      %p164 = scmp.eq.s32.totalorder %s163, 0
      %s166 = sadd.s32 %s165, 1
      %s167 = scalar_select %p164, %s165, %s166
      %p170 = pneg %p164
      %p171 = scmp.eq.s32.totalorder %s27, 15
      %p172 = por %p170, %p171
      %p173 = scmp.ne.s32.totalorder %s165, %s168
      %p174 = scmp.eq.s32.totalorder %s27, 0
      %p175 = por %p173, %p174
      %p176 = scmp.ne.s32.totalorder %s165, %s168
      %p177 = scmp.eq.s32.totalorder %s32, 15
      %p178 = por %p176, %p177
      %p179 = scmp.ne.s32.totalorder %s168, %s169
      %p180 = scmp.eq.s32.totalorder %s32, 0
      %p181 = por %p179, %p180
      %p182 = scmp.ne.s32.totalorder %s168, %s169
      %p183 = scmp.eq.s32.totalorder %s33, 15
      %p184 = por %p182, %p183
      %p186 = scmp.ne.s32.totalorder %s169, %s185
      %p187 = scmp.eq.s32.totalorder %s33, 0
      %p188 = por %p186, %p187
      %p189 = scmp.le.s32.totalorder 1, %s27
      %p190 = scmp.lt.s32.totalorder %s27, 17
      %p191 = pnand %p189, %p190
      %p192 = pneg %p191
      // Predicated region
      $region9: #{tpu_custom_call.1} parent=5 // pred_check
        _
      $region10: #{tpu_custom_call.1} parent=5 // pred_check_branch
        %194 = sbr.rel (%p191) target = $region12
      $region11: #{tpu_custom_call.1} parent=5 // pred_region
        %s195 = ssub.s32 %s27, 1
      $region12: #{tpu_custom_call.1} parent=5 // pred_fallthru
        _
      %p196 = scmp.lt.s32.totalorder %s27, 16
      // Predicated region
      $region13: #{tpu_custom_call.1} parent=5 // pred_check
        %p197 = pneg %p196
      $region14: #{tpu_custom_call.1} parent=5 // pred_check_branch
        %199 = sbr.rel (%p197) target = $region16
      $region15: #{tpu_custom_call.1} parent=5 // pred_region
        // Predicated region
        $region17: #{tpu_custom_call.1} parent=15 // pred_check
          %p200 = pneg %p59
        $region18: #{tpu_custom_call.1} parent=15 // pred_check_branch
          %202 = sbr.rel (%p200) target = $region20
        $region19: #{tpu_custom_call.1} parent=15 // pred_region
          %s203 = sand.u32 %s49, 1
          %s204 = scalar_lea.sflag [#allocation6], %s203
          %s205 = sand.u32 %s49, 1
          %s206 = smul.addr %s205, 4
          %s207 = scalar_lea.vmem [#allocation5], %s206
          %s209 = ssub.s32 64, 64
          %210 = vsyncadd %s204, %s209
          %s211 = smul.addr %s34, 64
          %s212 = scalar_lea.hbm %s1, %s211
          %s214 = sshll.u32 %s207, 4
          %s215 = int_to_ptr.vmem [resolvable:$true] %s214
          %217 = dma.hbm_to_vmem [thread:$0]  %s212, 64, %s215, %s204
        $region20: #{tpu_custom_call.1} parent=15 // pred_fallthru
          _
        // Predicated region
        $region21: #{tpu_custom_call.1} parent=15 // pred_check
          %p218 = pneg %p89
        $region22: #{tpu_custom_call.1} parent=15 // pred_check_branch
          %220 = sbr.rel (%p218) target = $region24
        $region23: #{tpu_custom_call.1} parent=15 // pred_region
          %s221 = sand.u32 %s27, 1
          %s222 = scalar_lea.sflag [#allocation9], %s221
          %s223 = sand.u32 %s79, 1
          %s224 = smul.addr %s223, 64
          %s225 = scalar_lea.vmem [#allocation8], %s224
          %s226 = sld [smem:[#allocation4 + %s34]]
          %s227 = smul.u32 16, %s35
          %s229 = ssub.s32 1024, 1024
          %230 = vsyncadd %s222, %s229
          %s231 = smul.addr %s226, 32
          %s232 = sadd.s32 %s227, %s231
          %s233 = smul.addr %s232, 64
          %s234 = scalar_lea.hbm %s2, %s233
          %s235 = sshll.u32 %s225, 4
          %s236 = int_to_ptr.vmem [resolvable:$true] %s235
          %241 = dma.hbm_to_vmem [thread:$0]  %s234, 1024, %s236, %s222, 64, 64, 4
        $region24: #{tpu_custom_call.1} parent=15 // pred_fallthru
          _
        // Predicated region
        $region25: #{tpu_custom_call.1} parent=15 // pred_check
          %p242 = pneg %p119
        $region26: #{tpu_custom_call.1} parent=15 // pred_check_branch
          %244 = sbr.rel (%p242) target = $region28
        $region27: #{tpu_custom_call.1} parent=15 // pred_region
          %s245 = sand.u32 %s27, 1
          %s246 = scalar_lea.sflag [#allocation9], %s245
          %s247 = sand.u32 %s109, 1
          %s248 = smul.addr %s247, 64
          %s249 = scalar_lea.vmem [#allocation10], %s248
          %s250 = sld [smem:[#allocation4 + %s34]]
          %s251 = smul.u32 16, %s35
          %s253 = ssub.s32 1024, 1024
          %254 = vsyncadd %s246, %s253
          %s255 = smul.addr %s250, 32
          %s256 = sadd.s32 %s251, %s255
          %s257 = smul.addr %s256, 64
          %s258 = scalar_lea.hbm %s3, %s257
          %s259 = sshll.u32 %s249, 4
          %s260 = int_to_ptr.vmem [resolvable:$true] %s259
          %265 = dma.hbm_to_vmem [thread:$0]  %s258, 1024, %s260, %s246, 64, 64, 4
        $region28: #{tpu_custom_call.1} parent=15 // pred_fallthru
          _
        // Predicated region
        $region29: #{tpu_custom_call.1} parent=15 // pred_check
          %p266 = pneg %p149
        $region30: #{tpu_custom_call.1} parent=15 // pred_check_branch
          %268 = sbr.rel (%p266) target = $region32
        $region31: #{tpu_custom_call.1} parent=15 // pred_region
          %s269 = sand.u32 %s139, 1
          %s270 = scalar_lea.sflag [#allocation12], %s269
          %s271 = sand.u32 %s139, 1
          %s272 = smul.addr %s271, 64
          %s273 = scalar_lea.vmem [#allocation11], %s272
          %s274 = sld [smem:[#allocation4 + %s34]]
          %s276 = ssub.s32 1024, 1024
          %277 = vsyncadd %s270, %s276
          %s278 = smul.addr %s274, 32
          %s279 = sadd.s32 %s35, %s278
          %s280 = smul.addr %s279, 64
          %s281 = scalar_lea.hbm %s4, %s280
          %s282 = sshll.u32 %s273, 4
          %s283 = int_to_ptr.vmem [resolvable:$true] %s282
          %288 = dma.hbm_to_vmem [thread:$0]  %s281, 1024, %s283, %s270, 128, 64, 4
        $region32: #{tpu_custom_call.1} parent=15 // pred_fallthru
          _
      $region16: #{tpu_custom_call.1} parent=5 // pred_fallthru
        _
      %p289 = scmp.le.s32.totalorder 1, %s27
      %p290 = scmp.lt.s32.totalorder %s27, 17
      %p291 = pnand %p289, %p290
      %p292 = pneg %p291
      // Predicated region
      $region33: #{tpu_custom_call.1} parent=5 // pred_check
        _
      $region34: #{tpu_custom_call.1} parent=5 // pred_check_branch
        %294 = sbr.rel (%p291) target = $region36
      $region35: #{tpu_custom_call.1} parent=5 // pred_region
        %s295 = ssub.s32 %s27, 1
        %s296 = sand.u32 %s52, 1
        %s297 = scalar_lea.sflag [#allocation6], %s296
        %s298 = sand.u32 %s52, 1
        %s299 = smul.addr %s298, 4
        %s300 = scalar_lea.vmem [#allocation5], %s299
        // Predicated region
        $region37: #{tpu_custom_call.1} parent=35 // pred_check
          %p301 = pneg %p65
        $region38: #{tpu_custom_call.1} parent=35 // pred_check_branch
          %303 = sbr.rel (%p301) target = $region40
        $region39: #{tpu_custom_call.1} parent=35 // pred_region
          %304 = dma.done %s297, 64
        $region40: #{tpu_custom_call.1} parent=35 // pred_fallthru
          _
        %s305 = sand.u32 %s32, 1
        %s306 = scalar_lea.sflag [#allocation9], %s305
        %s307 = sand.u32 %s82, 1
        %s308 = smul.addr %s307, 64
        %s309 = scalar_lea.vmem [#allocation8], %s308
        // Predicated region
        $region41: #{tpu_custom_call.1} parent=35 // pred_check
          %p310 = pneg %p95
        $region42: #{tpu_custom_call.1} parent=35 // pred_check_branch
          %312 = sbr.rel (%p310) target = $region44
        $region43: #{tpu_custom_call.1} parent=35 // pred_region
          %313 = dma.done %s306, 1024
        $region44: #{tpu_custom_call.1} parent=35 // pred_fallthru
          _
        %s314 = sand.u32 %s32, 1
        %s315 = scalar_lea.sflag [#allocation9], %s314
        %s316 = sand.u32 %s112, 1
        %s317 = smul.addr %s316, 64
        %s318 = scalar_lea.vmem [#allocation10], %s317
        // Predicated region
        $region45: #{tpu_custom_call.1} parent=35 // pred_check
          %p319 = pneg %p125
        $region46: #{tpu_custom_call.1} parent=35 // pred_check_branch
          %321 = sbr.rel (%p319) target = $region48
        $region47: #{tpu_custom_call.1} parent=35 // pred_region
          %322 = dma.done %s315, 1024
        $region48: #{tpu_custom_call.1} parent=35 // pred_fallthru
          _
        %s323 = sand.u32 %s142, 1
        %s324 = scalar_lea.sflag [#allocation12], %s323
        %s325 = sand.u32 %s142, 1
        %s326 = smul.addr %s325, 64
        %s327 = scalar_lea.vmem [#allocation11], %s326
        // Predicated region
        $region49: #{tpu_custom_call.1} parent=35 // pred_check
          %p328 = pneg %p155
        $region50: #{tpu_custom_call.1} parent=35 // pred_check_branch
          %330 = sbr.rel (%p328) target = $region52
        $region51: #{tpu_custom_call.1} parent=35 // pred_region
          %331 = dma.done %s324, 1024
        $region52: #{tpu_custom_call.1} parent=35 // pred_fallthru
          _
        %s332 = sand.u32 %s52, 1
        %s333 = scalar_lea.sflag [#allocation6], %s332
        %s334 = sand.u32 %s52, 1
        %s335 = smul.addr %s334, 4
        %s336 = scalar_lea.vmem [#allocation5], %s335
        %p337 = pneg %p65
        %p338 = pneg %p62
        %s339 = sand.u32 %s32, 1
        %s340 = scalar_lea.sflag [#allocation9], %s339
        %s341 = sand.u32 %s82, 1
        %s342 = smul.addr %s341, 64
        %s343 = scalar_lea.vmem [#allocation8], %s342
        %p344 = pneg %p95
        %p345 = pneg %p92
        %s346 = sand.u32 %s32, 1
        %s347 = scalar_lea.sflag [#allocation9], %s346
        %s348 = sand.u32 %s112, 1
        %s349 = smul.addr %s348, 64
        %s350 = scalar_lea.vmem [#allocation10], %s349
        %p351 = pneg %p125
        %p352 = pneg %p122
        %s353 = sand.u32 %s142, 1
        %s354 = scalar_lea.sflag [#allocation12], %s353
        %s355 = sand.u32 %s142, 1
        %s356 = smul.addr %s355, 64
        %s357 = scalar_lea.vmem [#allocation11], %s356
        %p358 = pneg %p155
        %p359 = pneg %p152
        %p360 = pneg %p181
        %p361 = pneg %p178
        %s362 = sand.u32 %s168, 1
        %s363 = scalar_lea.sflag [#allocation7], %s362
        %s364 = sand.u32 %s168, 1
        %s365 = smul.addr %s364, 8
        %s366 = scalar_lea.vmem [#allocation13], %s365
        %s367 = sld [smem:[#allocation4 + %s36]]
        %s368 = smul.u32 16, %s37
        %s369 = sld [smem:[#allocation4 + %s36]]
        %s370 = smul.u32 16, %s37
        %s371 = sld [smem:[#allocation4 + %s36]]
        %p373 = scmp.eq.s32.totalorder %s37, 0
        // Predicated region
        $region53: #{tpu_custom_call.1} parent=35 // pred_check
          %p374 = pneg %p373
        $region54: #{tpu_custom_call.1} parent=35 // pred_check_branch
          %376 = sbr.rel (%p374) target = $region56
        $region55: #{tpu_custom_call.1} parent=35 // pred_region
          %377 = vst [vmem:[#allocation2] sm:$0xff] 0.0
        $region56: #{tpu_custom_call.1} parent=35 // pred_fallthru
          _
        %v378 = vld [vmem:[%s300] sm:$0xf]
        %v379 = vld [vmem:[%s309] sm:$0xf]
        %v380 = vld [vmem:[%s309 + $0x4] sm:$0xf]
        %v381 = vld [vmem:[%s309 + $0x8] sm:$0xf]
        %v382 = vld [vmem:[%s309 + $0xc] sm:$0xf]
        %v383 = vld [vmem:[%s309 + $0x10] sm:$0xf]
        %v384 = vld [vmem:[%s309 + $0x14] sm:$0xf]
        %v385 = vld [vmem:[%s309 + $0x18] sm:$0xf]
        %v386 = vld [vmem:[%s309 + $0x1c] sm:$0xf]
        %v387 = vld [vmem:[%s309 + $0x20] sm:$0xf]
        %v388 = vld [vmem:[%s309 + $0x24] sm:$0xf]
        %v389 = vld [vmem:[%s309 + $0x28] sm:$0xf]
        %v390 = vld [vmem:[%s309 + $0x2c] sm:$0xf]
        %v391 = vld [vmem:[%s309 + $0x30] sm:$0xf]
        %v392 = vld [vmem:[%s309 + $0x34] sm:$0xf]
        %v393 = vld [vmem:[%s309 + $0x38] sm:$0xf]
        %v394 = vld [vmem:[%s309 + $0x3c] sm:$0xf]
        %v395 = vld [vmem:[%s318] sm:$0xf]
        %v396 = vld [vmem:[%s318 + $0x4] sm:$0xf]
        %v397 = vld [vmem:[%s318 + $0x8] sm:$0xf]
        %v398 = vld [vmem:[%s318 + $0xc] sm:$0xf]
        %v399 = vld [vmem:[%s318 + $0x10] sm:$0xf]
        %v400 = vld [vmem:[%s318 + $0x14] sm:$0xf]
        %v401 = vld [vmem:[%s318 + $0x18] sm:$0xf]
        %v402 = vld [vmem:[%s318 + $0x1c] sm:$0xf]
        %v403 = vld [vmem:[%s318 + $0x20] sm:$0xf]
        %v404 = vld [vmem:[%s318 + $0x24] sm:$0xf]
        %v405 = vld [vmem:[%s318 + $0x28] sm:$0xf]
        %v406 = vld [vmem:[%s318 + $0x2c] sm:$0xf]
        %v407 = vld [vmem:[%s318 + $0x30] sm:$0xf]
        %v408 = vld [vmem:[%s318 + $0x34] sm:$0xf]
        %v409 = vld [vmem:[%s318 + $0x38] sm:$0xf]
        %v410 = vld [vmem:[%s318 + $0x3c] sm:$0xf]
        %v411 = vld [vmem:[%s327] sm:$0xf]
        %v412 = vld [vmem:[%s327 + $0x4] sm:$0xf]
        %v413 = vld [vmem:[%s327 + $0x8] sm:$0xf]
        %v414 = vld [vmem:[%s327 + $0xc] sm:$0xf]
        %v415 = vld [vmem:[%s327 + $0x10] sm:$0xf]
        %v416 = vld [vmem:[%s327 + $0x14] sm:$0xf]
        %v417 = vld [vmem:[%s327 + $0x18] sm:$0xf]
        %v418 = vld [vmem:[%s327 + $0x1c] sm:$0xf]
        %v419 = vld [vmem:[%s327 + $0x20] sm:$0xf]
        %v420 = vld [vmem:[%s327 + $0x24] sm:$0xf]
        %v421 = vld [vmem:[%s327 + $0x28] sm:$0xf]
        %v422 = vld [vmem:[%s327 + $0x2c] sm:$0xf]
        %v423 = vld [vmem:[%s327 + $0x30] sm:$0xf]
        %v424 = vld [vmem:[%s327 + $0x34] sm:$0xf]
        %v425 = vld [vmem:[%s327 + $0x38] sm:$0xf]
        %v426 = vld [vmem:[%s327 + $0x3c] sm:$0xf]
        %v443 = vunpack.c.l.b16 %v379
        %v444 = vunpack.c.l.b16 %v380
        %v445 = vunpack.c.l.b16 %v381
        %v446 = vunpack.c.l.b16 %v382
        %v447 = vunpack.c.l.b16 %v383
        %v448 = vunpack.c.l.b16 %v384
        %v449 = vunpack.c.l.b16 %v385
        %v450 = vunpack.c.l.b16 %v386
        %v451 = vunpack.c.l.b16 %v387
        %v452 = vunpack.c.l.b16 %v388
        %v453 = vunpack.c.l.b16 %v389
        %v454 = vunpack.c.l.b16 %v390
        %v455 = vunpack.c.l.b16 %v391
        %v456 = vunpack.c.l.b16 %v392
        %v457 = vunpack.c.l.b16 %v393
        %v458 = vunpack.c.l.b16 %v394
        %v459 = vpack.c.b16 %v444, %v443
        %v460 = vpack.c.b16 %v446, %v445
        %v461 = vpack.c.b16 %v448, %v447
        %v462 = vpack.c.b16 %v450, %v449
        %v463 = vpack.c.b16 %v452, %v451
        %v464 = vpack.c.b16 %v454, %v453
        %v465 = vpack.c.b16 %v456, %v455
        %v466 = vpack.c.b16 %v458, %v457
        %475 = vmatprep.subr.bf16.mxu0 0
        %476 = vmatpush1.bf16.xpose.msra.mxu0 %v459
        %477 = vmatprep.subr.bf16.mxu0 0
        %478 = vmatpush1.bf16.xpose.msra.mxu0 %v460
        %479 = vmatprep.subr.bf16.mxu0 0
        %480 = vmatpush1.bf16.xpose.msra.mxu0 %v461
        %481 = vmatprep.subr.bf16.mxu0 0
        %482 = vmatpush1.bf16.xpose.msra.mxu0 %v462
        %483 = vmatprep.subr.bf16.mxu0 0
        %484 = vmatpush1.bf16.xpose.msra.mxu0 %v463
        %485 = vmatprep.subr.bf16.mxu0 0
        %486 = vmatpush1.bf16.xpose.msra.mxu0 %v464
        %487 = vmatprep.subr.bf16.mxu0 0
        %488 = vmatpush1.bf16.xpose.msra.mxu0 %v465
        %489 = vmatprep.subr.bf16.mxu0 0
        %490 = vmatpush1.bf16.xpose.msra.mxu0 %v466
        %491 = vmatprep.subr.bf16.mxu0 0
        %492 = vmatpush1.bf16.xpose.msra.mxu0 0
        %493 = vmatprep.subr.bf16.mxu0 0
        %494 = vmatpush1.bf16.xpose.msra.mxu0 0
        %495 = vmatprep.subr.bf16.mxu0 0
        %496 = vmatpush1.bf16.xpose.msra.mxu0 0
        %497 = vmatprep.subr.bf16.mxu0 0
        %498 = vmatpush1.bf16.xpose.msra.mxu0 0
        %499 = vmatprep.subr.bf16.mxu0 0
        %500 = vmatpush1.bf16.xpose.msra.mxu0 0
        %501 = vmatprep.subr.bf16.mxu0 0
        %502 = vmatpush1.bf16.xpose.msra.mxu0 0
        %503 = vmatprep.subr.bf16.mxu0 0
        %504 = vmatpush1.bf16.xpose.msra.mxu0 0
        %505 = vmatprep.subr.bf16.mxu0 0
        %506 = vmatpush1.bf16.xpose.msra.mxu0 0
        %507 = vmatprep.mubr.bf16.mxu0 0
        %508 = vmatmul.mubr.bf16.gmra.mrb[0].mxu0 %v378
        %v509 = vpop.f32.mrb[0].mxu0
        %v510 = vadd.f32 0.0, %v509
        %v511 = vpop.f32.mrb[0].mxu0
        %v512 = vpop.f32.mrb[0].mxu0
        %v513 = vpop.f32.mrb[0].mxu0
        %514 = vdwg.mxu0
        %v531 = vunpack.c.l.b16 %v395
        %v532 = vunpack.c.l.b16 %v396
        %v533 = vunpack.c.l.b16 %v397
        %v534 = vunpack.c.l.b16 %v398
        %v535 = vunpack.c.l.b16 %v399
        %v536 = vunpack.c.l.b16 %v400
        %v537 = vunpack.c.l.b16 %v401
        %v538 = vunpack.c.l.b16 %v402
        %v539 = vunpack.c.l.b16 %v403
        %v540 = vunpack.c.l.b16 %v404
        %v541 = vunpack.c.l.b16 %v405
        %v542 = vunpack.c.l.b16 %v406
        %v543 = vunpack.c.l.b16 %v407
        %v544 = vunpack.c.l.b16 %v408
        %v545 = vunpack.c.l.b16 %v409
        %v546 = vunpack.c.l.b16 %v410
        %v547 = vpack.c.b16 %v532, %v531
        %v548 = vpack.c.b16 %v534, %v533
        %v549 = vpack.c.b16 %v536, %v535
        %v550 = vpack.c.b16 %v538, %v537
        %v551 = vpack.c.b16 %v540, %v539
        %v552 = vpack.c.b16 %v542, %v541
        %v553 = vpack.c.b16 %v544, %v543
        %v554 = vpack.c.b16 %v546, %v545
        %563 = vmatprep.subr.bf16.mxu0 0
        %564 = vmatpush1.bf16.xpose.msra.mxu0 %v547
        %565 = vmatprep.subr.bf16.mxu0 0
        %566 = vmatpush1.bf16.xpose.msra.mxu0 %v548
        %567 = vmatprep.subr.bf16.mxu0 0
        %568 = vmatpush1.bf16.xpose.msra.mxu0 %v549
        %569 = vmatprep.subr.bf16.mxu0 0
        %570 = vmatpush1.bf16.xpose.msra.mxu0 %v550
        %571 = vmatprep.subr.bf16.mxu0 0
        %572 = vmatpush1.bf16.xpose.msra.mxu0 %v551
        %573 = vmatprep.subr.bf16.mxu0 0
        %574 = vmatpush1.bf16.xpose.msra.mxu0 %v552
        %575 = vmatprep.subr.bf16.mxu0 0
        %576 = vmatpush1.bf16.xpose.msra.mxu0 %v553
        %577 = vmatprep.subr.bf16.mxu0 0
        %578 = vmatpush1.bf16.xpose.msra.mxu0 %v554
        %579 = vmatprep.subr.bf16.mxu0 0
        %580 = vmatpush1.bf16.xpose.msra.mxu0 0
        %581 = vmatprep.subr.bf16.mxu0 0
        %582 = vmatpush1.bf16.xpose.msra.mxu0 0
        %583 = vmatprep.subr.bf16.mxu0 0
        %584 = vmatpush1.bf16.xpose.msra.mxu0 0
        %585 = vmatprep.subr.bf16.mxu0 0
        %586 = vmatpush1.bf16.xpose.msra.mxu0 0
        %587 = vmatprep.subr.bf16.mxu0 0
        %588 = vmatpush1.bf16.xpose.msra.mxu0 0
        %589 = vmatprep.subr.bf16.mxu0 0
        %590 = vmatpush1.bf16.xpose.msra.mxu0 0
        %591 = vmatprep.subr.bf16.mxu0 0
        %592 = vmatpush1.bf16.xpose.msra.mxu0 0
        %593 = vmatprep.subr.bf16.mxu0 0
        %594 = vmatpush1.bf16.xpose.msra.mxu0 0
        %595 = vmatprep.mubr.bf16.mxu0 0
        %596 = vmatmul.mubr.bf16.gmra.mrb[0].mxu0 %v378
        %v597 = vpop.f32.mrb[0].mxu0
        %v598 = vadd.f32 0.0, %v597
        %v599 = vpop.f32.mrb[0].mxu0
        %v600 = vpop.f32.mrb[0].mxu0
        %v601 = vpop.f32.mrb[0].mxu0
        %602 = vdwg.mxu0
        %v603 = vxor.u32 %v510, 2147483648
        %v604 = vmul.f32 %v603, 1.442695
        %v605 = vpow.pop %v604
        %v606 = vadd.f32 %v605, 1.0
        %v607 = vrcp.pop %v606
        %v608 = vmul.f32 1.0, %v607
        %v609 = vmul.f32 %v510, %v608
        %v610 = vmul.f32 %v609, %v598
        %v611 = vpack.c.bf16 %v610, %v610
        %v612 = vld [vmem:[#allocation2] sm:$0xff]
        %v629 = vunpack.c.l.b16 %v411
        %v630 = vunpack.c.l.b16 %v412
        %v631 = vunpack.c.l.b16 %v413
        %v632 = vunpack.c.l.b16 %v414
        %v633 = vunpack.c.l.b16 %v415
        %v634 = vunpack.c.l.b16 %v416
        %v635 = vunpack.c.l.b16 %v417
        %v636 = vunpack.c.l.b16 %v418
        %v637 = vunpack.c.l.b16 %v419
        %v638 = vunpack.c.l.b16 %v420
        %v639 = vunpack.c.l.b16 %v421
        %v640 = vunpack.c.l.b16 %v422
        %v641 = vunpack.c.l.b16 %v423
        %v642 = vunpack.c.l.b16 %v424
        %v643 = vunpack.c.l.b16 %v425
        %v644 = vunpack.c.l.b16 %v426
        %v645 = vpack.c.b16 %v630, %v629
        %v646 = vpack.c.b16 %v632, %v631
        %v647 = vpack.c.b16 %v634, %v633
        %v648 = vpack.c.b16 %v636, %v635
        %v649 = vpack.c.b16 %v638, %v637
        %v650 = vpack.c.b16 %v640, %v639
        %v651 = vpack.c.b16 %v642, %v641
        %v652 = vpack.c.b16 %v644, %v643
        %661 = vmatprep.subr.bf16.mxu0 0
        %662 = vmatpush1.bf16.xpose.msra.mxu0 %v645
        %663 = vmatprep.subr.bf16.mxu0 0
        %664 = vmatpush1.bf16.xpose.msra.mxu0 %v646
        %665 = vmatprep.subr.bf16.mxu0 0
        %666 = vmatpush1.bf16.xpose.msra.mxu0 %v647
        %667 = vmatprep.subr.bf16.mxu0 0
        %668 = vmatpush1.bf16.xpose.msra.mxu0 %v648
        %669 = vmatprep.subr.bf16.mxu0 0
        %670 = vmatpush1.bf16.xpose.msra.mxu0 %v649
        %671 = vmatprep.subr.bf16.mxu0 0
        %672 = vmatpush1.bf16.xpose.msra.mxu0 %v650
        %673 = vmatprep.subr.bf16.mxu0 0
        %674 = vmatpush1.bf16.xpose.msra.mxu0 %v651
        %675 = vmatprep.subr.bf16.mxu0 0
        %676 = vmatpush1.bf16.xpose.msra.mxu0 %v652
        %677 = vmatprep.subr.bf16.mxu0 0
        %678 = vmatpush1.bf16.xpose.msra.mxu0 0
        %679 = vmatprep.subr.bf16.mxu0 0
        %680 = vmatpush1.bf16.xpose.msra.mxu0 0
        %681 = vmatprep.subr.bf16.mxu0 0
        %682 = vmatpush1.bf16.xpose.msra.mxu0 0
        %683 = vmatprep.subr.bf16.mxu0 0
        %684 = vmatpush1.bf16.xpose.msra.mxu0 0
        %685 = vmatprep.subr.bf16.mxu0 0
        %686 = vmatpush1.bf16.xpose.msra.mxu0 0
        %687 = vmatprep.subr.bf16.mxu0 0
        %688 = vmatpush1.bf16.xpose.msra.mxu0 0
        %689 = vmatprep.subr.bf16.mxu0 0
        %690 = vmatpush1.bf16.xpose.msra.mxu0 0
        %691 = vmatprep.subr.bf16.mxu0 0
        %692 = vmatpush1.bf16.xpose.msra.mxu0 0
        %693 = vmatprep.mubr.bf16.mxu0 0
        %694 = vmatmul.mubr.bf16.gmra.mrb[0].mxu0 %v611
        %v695 = vpop.f32.mrb[0].mxu0
        %v696 = vadd.f32 0.0, %v695
        %v697 = vpop.f32.mrb[0].mxu0
        %v698 = vpop.f32.mrb[0].mxu0
        %v699 = vpop.f32.mrb[0].mxu0
        %700 = vdwg.mxu0
        %v701 = vadd.f32 %v612, %v696
        %702 = vst [vmem:[#allocation2] sm:$0xff] %v701
        %p703 = scmp.eq.s32.totalorder %s37, 1
        // Predicated region
        $region57: #{tpu_custom_call.1} parent=35 // pred_check
          %p704 = pneg %p703
        $region58: #{tpu_custom_call.1} parent=35 // pred_check_branch
          %706 = sbr.rel (%p704) target = $region60
        $region59: #{tpu_custom_call.1} parent=35 // pred_region
          %v707 = vld [vmem:[#allocation2] sm:$0xff]
          %708 = vst [vmem:[%s366] sm:$0xff] %v707
        $region60: #{tpu_custom_call.1} parent=35 // pred_fallthru
          _
        %s709 = sand.u32 %s168, 1
        %s710 = scalar_lea.sflag [#allocation7], %s709
        %s711 = sand.u32 %s168, 1
        %s712 = smul.addr %s711, 8
        %s713 = scalar_lea.vmem [#allocation13], %s712
        // Predicated region
        $region61: #{tpu_custom_call.1} parent=35 // pred_check
          %p714 = pneg %p178
        $region62: #{tpu_custom_call.1} parent=35 // pred_check_branch
          %716 = sbr.rel (%p714) target = $region64
        $region63: #{tpu_custom_call.1} parent=35 // pred_region
          %s718 = ssub.s32 128, 128
          %719 = vsyncadd %s710, %s718
          %s720 = smul.addr %s36, 128
          %s721 = scalar_lea.hbm %s5, %s720
          %s723 = sshll.u32 %s713, 4
          %s724 = int_to_ptr.vmem [resolvable:$true] %s723
          %726 = dma.vmem_to_hbm [thread:$0]  %s724, 128, %s721, %s710
        $region64: #{tpu_custom_call.1} parent=35 // pred_fallthru
          _
      $region36: #{tpu_custom_call.1} parent=5 // pred_fallthru
        _
      %p727 = scmp.le.s32.totalorder 2, %s27
      // Predicated region
      $region65: #{tpu_custom_call.1} parent=5 // pred_check
        %p728 = pneg %p727
      $region66: #{tpu_custom_call.1} parent=5 // pred_check_branch
        %730 = sbr.rel (%p728) target = $region68
      $region67: #{tpu_custom_call.1} parent=5 // pred_region
        %s731 = ssub.s32 %s27, 2
        // Predicated region
        $region69: #{tpu_custom_call.1} parent=67 // pred_check
          %p732 = pneg %p184
        $region70: #{tpu_custom_call.1} parent=67 // pred_check_branch
          %734 = sbr.rel (%p732) target = $region72
        $region71: #{tpu_custom_call.1} parent=67 // pred_region
          %s735 = sand.u32 %s169, 1
          %s736 = scalar_lea.sflag [#allocation7], %s735
          %s737 = sand.u32 %s169, 1
          %s738 = smul.addr %s737, 8
          %s739 = scalar_lea.vmem [#allocation13], %s738
          %740 = dma.done %s736, 128
        $region72: #{tpu_custom_call.1} parent=67 // pred_fallthru
          _
      $region68: #{tpu_custom_call.1} parent=5 // pred_fallthru
        _
    $region6: #{tpu_custom_call.1} parent=1 // loop_footer
      %s31 = sadd.s32 1, %s27
    $region7: #{tpu_custom_call.1} parent=1 // loop_footer_branch
      %26 = sbr.rel target = $region3
    $region8: #{tpu_custom_call.1} parent=1 // loop_exit
      _
    %741 = vsyncpa [#allocation6], 1
    %s742 = scalar_lea.sflag [#allocation6], 1
    %743 = vsyncpa %s742, 1
    %744 = vsyncpa [#allocation9], 1
    %s745 = scalar_lea.sflag [#allocation9], 1
    %746 = vsyncpa %s745, 1
    %747 = vsyncpa [#allocation12], 1
    %s748 = scalar_lea.sflag [#allocation12], 1
    %749 = vsyncpa %s748, 1
    %750 = vsyncpa [#allocation7], 1
    %s751 = scalar_lea.sflag [#allocation7], 1
    %752 = vsyncpa %s751, 1

</llo_original>
